<compile_context>
chip_gen: v6e
topology: v6e:2x2x1
jax: 0.10.0
libtpu: 0.0.40
codegen_flags: <defaults>
</compile_context>

<pallas_src>
import functools

import jax
import jax.numpy as jnp
from jax import lax
from jax.experimental import pallas as pl
from jax.experimental.pallas import tpu as pltpu


def _round_up(x, m):
    return ((x + m - 1) // m) * m


def _mlp_kernel(x_ref, w1_ref, b1_ref, w2_ref, b2_ref, o_ref):
    # fc1 on the MXU: cast the f32 activation tile to bf16 in-kernel (avoids a
    # separate HBM cast pass); accumulate in f32.
    x_bf16 = x_ref[...].astype(jnp.bfloat16)
    h = jnp.dot(x_bf16, w1_ref[...], preferred_element_type=jnp.float32)
    # Bias add + ReLU in f32 on the VPU (v5e has no bf16 VPU).
    h = jnp.maximum(h + b1_ref[...], 0.0)
    # fc2 (OUT == 1): contract over HID on the MXU with the (1, HID) weight row
    # as LHS so the result is a lane-dense (1, tb) row, not a lane-sparse
    # (tb, 1) column. h is cast to bf16 only for this contraction.
    y = lax.dot_general(
        w2_ref[...], h.astype(jnp.bfloat16),
        dimension_numbers=(((1,), (1,)), ((), ())),
        preferred_element_type=jnp.float32)
    y = y + b2_ref[0, 0]
    # Sigmoid as a single EUP tanh push.
    o_ref[...] = (0.5 * (jnp.tanh(0.5 * y) + 1.0)).astype(o_ref.dtype)


@functools.partial(jax.jit, static_argnames=("block_b",))
def rna_classifier_forward(x, w1, b1, w2, b2, *, block_b=8192):
    """Forward pass of RNAClassifier.

    x:  (B, IN)  float32 activations
    w1: (IN, HID), b1: (1, HID) or (HID,)   -- fc1 (weight transposed vs torch)
    w2: (HID, OUT), b2: (1, OUT) or (OUT,)  -- fc2 (OUT must be 1)
    Returns (B, OUT) float32 sigmoid probabilities.
    """
    B, IN = x.shape
    HID = w1.shape[1]
    OUT = w2.shape[1]
    assert OUT == 1, "lane-dense fc2 path assumes output_size == 1"

    # Batch tile: big enough to amortize per-grid-step overhead, capped near
    # B/2 (rounded to the sublane multiple) so the grid keeps >= 2 steps.
    half_b = max(8, _round_up(pl.cdiv(B, 2), 8))
    tb = max(8, _round_up(min(block_b, half_b), 8))
    num_tiles = pl.cdiv(B, tb)

    # Tiny resident operands: wrapper-side prep cost is negligible.
    w1_bf16 = w1.astype(jnp.bfloat16)                           # (IN, HID)
    b1_row = jnp.reshape(b1, (1, HID)).astype(jnp.float32)      # (1, HID)
    w2_row = jnp.reshape(w2, (OUT, HID)).astype(jnp.bfloat16)   # (1, HID); OUT==1
    b2_s = jnp.reshape(b2, (1, 1)).astype(jnp.float32)          # SMEM scalar

    out = pl.pallas_call(
        _mlp_kernel,
        out_shape=jax.ShapeDtypeStruct((num_tiles, 1, tb), jnp.float32),
        grid=(num_tiles,),
        in_specs=[
            pl.BlockSpec((tb, IN), lambda i: (i, 0)),            # x: streamed f32
            pl.BlockSpec((IN, HID), lambda i: (0, 0)),           # w1: resident
            pl.BlockSpec((1, HID), lambda i: (0, 0)),            # b1: resident
            pl.BlockSpec((OUT, HID), lambda i: (0, 0)),          # w2 row: resident
            pl.BlockSpec(memory_space=pltpu.MemorySpace.SMEM),   # b2: scalar
        ],
        # Lane-dense (1, tb) output row per grid step; leading dim squeezed.
        out_specs=pl.BlockSpec((None, 1, tb), lambda i: (i, 0, 0)),
        compiler_params=pltpu.CompilerParams(
            dimension_semantics=("parallel",)),
    )(x, w1_bf16, b1_row, w2_row, b2_s)

    # (num_tiles, 1, tb) -> (num_tiles*tb, 1); rows past B come from the
    # partial last x tile (garbage, row-independent) and are discarded here.
    return jnp.reshape(out, (num_tiles * tb, 1))[:B]


def init_params(key, input_size, hidden_size, output_size=1):
    """Deterministic init mimicking PyTorch nn.Linear (uniform +-1/sqrt(fan_in))."""
    k1, k2, k3, k4 = jax.random.split(key, 4)
    bound1 = 1.0 / jnp.sqrt(input_size)
    bound2 = 1.0 / jnp.sqrt(hidden_size)
    w1 = jax.random.uniform(k1, (input_size, hidden_size), jnp.float32,
                            -bound1, bound1)
    b1 = jax.random.uniform(k2, (1, hidden_size), jnp.float32, -bound1, bound1)
    w2 = jax.random.uniform(k3, (hidden_size, output_size), jnp.float32,
                            -bound2, bound2)
    b2 = jax.random.uniform(k4, (1, output_size), jnp.float32, -bound2, bound2)
    return w1, b1, w2, b2


if __name__ == "__main__":
    # Small shapes consistent with the module: batch=10 (exercises the partial
    # last batch tile), input_size=16, hidden=32, output=1.
    B, IN, HID, OUT = 10, 16, 32, 1
    key = jax.random.PRNGKey(0)
    kx, kp = jax.random.split(key)
    x = jax.random.normal(kx, (B, IN), jnp.float32)
    w1, b1, w2, b2 = init_params(kp, IN, HID, OUT)

    out = rna_classifier_forward(x, w1, b1, w2, b2)
    out = jax.block_until_ready(out)

    # Pure-JAX f32 reference. The kernel uses bf16 MXU inputs, so the
    # tolerance is loosened accordingly.
    ref = jax.nn.sigmoid(jnp.maximum(x @ w1 + b1, 0.0) @ w2 + b2)
    assert out.shape == (B, OUT)
    assert jnp.allclose(out, ref, atol=3e-2, rtol=0.0), (
        f"max abs err {jnp.max(jnp.abs(out - ref))}")

    print("KERNEL_OK")
</pallas_src>

<mosaic_0001>
module attributes {stable_mosaic.version = 11 : i64} {
  func.func @_mlp_kernel(%arg0: i32, %arg1: memref<8x16xf32, #tpu.memory_space<vmem>>, %arg2: memref<16x32xbf16, #tpu.memory_space<vmem>>, %arg3: memref<1x32xf32, #tpu.memory_space<vmem>>, %arg4: memref<1x32xbf16, #tpu.memory_space<vmem>>, %arg5: memref<1x1xf32, #tpu.memory_space<smem>>, %arg6: memref<1x1x8xf32, #tpu.memory_space<vmem>>) attributes {dimension_semantics = [#tpu.dimension_semantics<parallel>], iteration_bounds = array<i64: 2>, scalar_prefetch = 0 : i64, scratch_operands = 0 : i64, tpu.core_type = #tpu.core_type<tc>, window_params = [{transform_indices = @transform_0, window_bounds = array<i64: 8, 16>}, {pipeline_mode = #tpu.pipeline_mode<synchronous>, transform_indices = @transform_1, window_bounds = array<i64: 16, 32>}, {pipeline_mode = #tpu.pipeline_mode<synchronous>, transform_indices = @transform_2, window_bounds = array<i64: 1, 32>}, {pipeline_mode = #tpu.pipeline_mode<synchronous>, transform_indices = @transform_3, window_bounds = array<i64: 1, 32>}, {transform_indices = @transform_4, window_bounds = array<i64: 1, 1>}, {transform_indices = @transform_5, window_bounds = array<i64: 1, 1, 8>}]} {
    %c0 = arith.constant 0 : index
    %c0_0 = arith.constant 0 : index
    %0 = vector.load %arg1[%c0, %c0_0] : memref<8x16xf32, #tpu.memory_space<vmem>>, vector<8x16xf32>
    %1 = arith.truncf %0 : vector<8x16xf32> to vector<8x16xbf16>
    %c0_1 = arith.constant 0 : index
    %c0_2 = arith.constant 0 : index
    %2 = vector.load %arg2[%c0_1, %c0_2] : memref<16x32xbf16, #tpu.memory_space<vmem>>, vector<16x32xbf16>
    %cst = arith.constant dense<0.000000e+00> : vector<8x32xf32>
    %3 = tpu.matmul %1, %2, %cst {dimension_numbers = #tpu.dot_dimension_numbers<[1], [0], [0], [1], [0, 0, 1, 1], [], []>} : vector<8x16xbf16>, vector<16x32xbf16>, vector<8x32xf32> -> vector<8x32xf32>
    %c0_3 = arith.constant 0 : index
    %c0_4 = arith.constant 0 : index
    %4 = vector.load %arg3[%c0_3, %c0_4] : memref<1x32xf32, #tpu.memory_space<vmem>>, vector<1x32xf32>
    %5 = vector.broadcast %4 : vector<1x32xf32> to vector<8x32xf32>
    %6 = arith.addf %3, %5 : vector<8x32xf32>
    %cst_5 = arith.constant 0.000000e+00 : f32
    %7 = vector.broadcast %cst_5 : f32 to vector<8x32xf32>
    %8 = arith.maximumf %6, %7 : vector<8x32xf32>
    %c0_6 = arith.constant 0 : index
    %c0_7 = arith.constant 0 : index
    %9 = vector.load %arg4[%c0_6, %c0_7] : memref<1x32xbf16, #tpu.memory_space<vmem>>, vector<1x32xbf16>
    %10 = arith.truncf %8 : vector<8x32xf32> to vector<8x32xbf16>
    %cst_8 = arith.constant dense<0.000000e+00> : vector<1x8xf32>
    %11 = tpu.matmul %9, %10, %cst_8 {dimension_numbers = #tpu.dot_dimension_numbers<[1], [1], [0], [0], [0, 0, 1, 0], [], []>} : vector<1x32xbf16>, vector<8x32xbf16>, vector<1x8xf32> -> vector<1x8xf32>
    %c0_9 = arith.constant 0 : index
    %c0_10 = arith.constant 0 : index
    %12 = memref.load %arg5[%c0_9, %c0_10] : memref<1x1xf32, #tpu.memory_space<smem>>
    %13 = vector.broadcast %12 : f32 to vector<1x8xf32>
    %14 = arith.addf %11, %13 : vector<1x8xf32>
    %cst_11 = arith.constant 5.000000e-01 : f32
    %15 = vector.broadcast %cst_11 : f32 to vector<1x8xf32>
    %16 = arith.mulf %15, %14 : vector<1x8xf32>
    %17 = math.tanh %16 : vector<1x8xf32>
    %cst_12 = arith.constant 1.000000e+00 : f32
    %18 = vector.broadcast %cst_12 : f32 to vector<1x8xf32>
    %19 = arith.addf %17, %18 : vector<1x8xf32>
    %cst_13 = arith.constant 5.000000e-01 : f32
    %20 = vector.broadcast %cst_13 : f32 to vector<1x8xf32>
    %21 = arith.mulf %20, %19 : vector<1x8xf32>
    %c0_14 = arith.constant 0 : index
    %c0_15 = arith.constant 0 : index
    %c0_16 = arith.constant 0 : index
    %22 = vector.load %arg6[%c0_14, %c0_15, %c0_16] : memref<1x1x8xf32, #tpu.memory_space<vmem>>, vector<1x1x8xf32>
    %23 = vector.shape_cast %22 : vector<1x1x8xf32> to vector<1x8xf32>
    %24 = vector.shape_cast %21 : vector<1x8xf32> to vector<1x1x8xf32>
    tpu.vector_store %arg6[%c0_14, %c0_15, %c0_16], %24 {strides = array<i32>} : memref<1x1x8xf32, #tpu.memory_space<vmem>>, vector<1x1x8xf32>,
    return
  }
  func.func @transform_0(%arg0: i32) -> (i32, i32) {
    %c0_i32 = arith.constant 0 : i32
    %c0_i32_0 = arith.constant 0 : i32
    return %arg0, %c0_i32 : i32, i32
  }
  func.func @transform_1(%arg0: i32) -> (i32, i32) {
    %c0_i32 = arith.constant 0 : i32
    %c0_i32_0 = arith.constant 0 : i32
    %c0_i32_1 = arith.constant 0 : i32
    return %c0_i32, %c0_i32_0 : i32, i32
  }
  func.func @transform_2(%arg0: i32) -> (i32, i32) {
    %c0_i32 = arith.constant 0 : i32
    %c0_i32_0 = arith.constant 0 : i32
    %c0_i32_1 = arith.constant 0 : i32
    return %c0_i32, %c0_i32_0 : i32, i32
  }
  func.func @transform_3(%arg0: i32) -> (i32, i32) {
    %c0_i32 = arith.constant 0 : i32
    %c0_i32_0 = arith.constant 0 : i32
    %c0_i32_1 = arith.constant 0 : i32
    return %c0_i32, %c0_i32_0 : i32, i32
  }
  func.func @transform_4(%arg0: i32) -> (i32, i32) {
    %c0_i32 = arith.constant 0 : i32
    %c0_i32_0 = arith.constant 0 : i32
    %c0_i32_1 = arith.constant 0 : i32
    return %c0_i32, %c0_i32_0 : i32, i32
  }
  func.func @transform_5(%arg0: i32) -> (i32, i32, i32) {
    %c0_i32 = arith.constant 0 : i32
    %c0_i32_0 = arith.constant 0 : i32
    %c0_i32_1 = arith.constant 0 : i32
    return %arg0, %c0_i32, %c0_i32_0 : i32, i32, i32
  }
}

</mosaic_0001>

<llo_original>
// kernel: rna_classifier_forward.1
$region0: #{rna_classifier_forward.1}
  #allocation0 [shape = 'u32[]', space=smem, size = 0x4, offset = 0x4, fixed_abs, tag = 'smem constant byte address 0x4 - core index']
  #allocation1 [shape = 'u32[144,128]{1,0:T(1,128)}', space=vmem, size = 0x12000, scoped, tag = 'internal scratch']
  #allocation2 [shape = 'f32[1,1]{1,0:T(1,128)S(6)}', space=smem, size = 0x200, scoped, tag = 'scoped memory for rna_classifier_forward.1']
  %s0 = inlined_call_operand.vmem [shape: f32[10,16], index: 0, kind: input, shape index: {}]
  %s1 = inlined_call_operand.vmem [shape: bf16[16,32], index: 1, kind: input, shape index: {}]
  %s2 = inlined_call_operand.vmem [shape: f32[1,32], index: 2, kind: input, shape index: {}]
  %s3 = inlined_call_operand.vmem [shape: bf16[1,32], index: 3, kind: input, shape index: {}]
  %s4 = inlined_call_operand.<no memory space> [shape: f32[1,1], index: 4, kind: input, shape index: {}]
  %s5 = inlined_call_operand.vmem [shape: f32[2,1,8], index: 5, kind: output, shape index: {}]
  %s6 = sld [smem:[#allocation0]]
  $region53: #{rna_classifier_forward.1} parent=0
    _
  %s8 = ssub.s32 1, %s6
  %s9 = scalar_select 0, %s8, %s6
  %10 = sst [smem:[#allocation2]] %s4
  loop: start=0, step=1, limit=4
  $region2: #{rna_classifier_forward.1} parent=0 // loop_pre_header
    _
  $region3: #{rna_classifier_forward.1} parent=0 // loop_header
    %s12 = sphi 0, %s16
    %p13 = scmp.ge.s32.totalorder %s12, 4
    %s22 = sphi 0, %s24
    %s25 = sphi 0, %s22
    %s26 = sphi 0, %s25
    %s42 = sphi 0, %s26
    %s46 = sphi 0, %s46
    %s48 = sphi 0, %s46
    %s49 = sphi 0, %s48
    %s63 = sphi 0, %s49
    %s67 = sphi 0, %s67
    %s69 = sphi 0, %s67
    %s70 = sphi 0, %s69
    %s84 = sphi 0, %s70
    %s88 = sphi 0, %s88
    %s90 = sphi 0, %s88
    %s91 = sphi 0, %s90
    %s105 = sphi 0, %s91
    %s109 = sphi 0, %s109
    %s111 = sphi 0, %s109
    %s112 = sphi 0, %s111
    %s126 = sphi 0, %s112
    %s132 = sphi 0, %s134
    %s135 = sphi 0, %s132
    %s136 = sphi 0, %s135
    %s152 = sphi 0, %s136
  $region4: #{rna_classifier_forward.1} parent=0 // loop_header_branch
    %15 = sbr.rel (%p13) target = $region8
  $region5: #{rna_classifier_forward.1} parent=0 // loop_body
    %s17 = ssub.s32 %s12, 1
    %s18 = ssub.s32 %s12, 2
    %s19 = sadd.s32 %s12, 1
    %s20 = ssub.s32 %s12, %s19
    %p21 = scmp.eq.s32.totalorder %s20, 0
    %s23 = sadd.s32 %s22, 1
    %s24 = scalar_select %p21, %s22, %s23
    %p27 = pneg %p21
    %p28 = scmp.eq.s32.totalorder %s12, 1
    %p29 = por %p27, %p28
    %p30 = scmp.ne.s32.totalorder %s22, %s25
    %p31 = scmp.eq.s32.totalorder %s12, 0
    %p32 = por %p30, %p31
    %p33 = scmp.ne.s32.totalorder %s22, %s25
    %p34 = scmp.eq.s32.totalorder %s17, 1
    %p35 = por %p33, %p34
    %p36 = scmp.ne.s32.totalorder %s25, %s26
    %p37 = scmp.eq.s32.totalorder %s17, 0
    %p38 = por %p36, %p37
    %p39 = scmp.ne.s32.totalorder %s25, %s26
    %p40 = scmp.eq.s32.totalorder %s18, 1
    %p41 = por %p39, %p40
    %p43 = scmp.ne.s32.totalorder %s26, %s42
    %p44 = scmp.eq.s32.totalorder %s18, 0
    %p45 = por %p43, %p44
    %s47 = sadd.s32 %s46, 1
    %p50 = scmp.eq.s32.totalorder %s12, 1
    %p51 = scmp.ne.s32.totalorder %s46, %s48
    %p52 = scmp.eq.s32.totalorder %s12, 0
    %p53 = por %p51, %p52
    %p54 = scmp.ne.s32.totalorder %s46, %s48
    %p55 = scmp.eq.s32.totalorder %s17, 1
    %p56 = por %p54, %p55
    %p57 = scmp.ne.s32.totalorder %s48, %s49
    %p58 = scmp.eq.s32.totalorder %s17, 0
    %p59 = por %p57, %p58
    %p60 = scmp.ne.s32.totalorder %s48, %s49
    %p61 = scmp.eq.s32.totalorder %s18, 1
    %p62 = por %p60, %p61
    %p64 = scmp.ne.s32.totalorder %s49, %s63
    %p65 = scmp.eq.s32.totalorder %s18, 0
    %p66 = por %p64, %p65
    %s68 = sadd.s32 %s67, 1
    %p71 = scmp.eq.s32.totalorder %s12, 1
    %p72 = scmp.ne.s32.totalorder %s67, %s69
    %p73 = scmp.eq.s32.totalorder %s12, 0
    %p74 = por %p72, %p73
    %p75 = scmp.ne.s32.totalorder %s67, %s69
    %p76 = scmp.eq.s32.totalorder %s17, 1
    %p77 = por %p75, %p76
    %p78 = scmp.ne.s32.totalorder %s69, %s70
    %p79 = scmp.eq.s32.totalorder %s17, 0
    %p80 = por %p78, %p79
    %p81 = scmp.ne.s32.totalorder %s69, %s70
    %p82 = scmp.eq.s32.totalorder %s18, 1
    %p83 = por %p81, %p82
    %p85 = scmp.ne.s32.totalorder %s70, %s84
    %p86 = scmp.eq.s32.totalorder %s18, 0
    %p87 = por %p85, %p86
    %s89 = sadd.s32 %s88, 1
    %p92 = scmp.eq.s32.totalorder %s12, 1
    %p93 = scmp.ne.s32.totalorder %s88, %s90
    %p94 = scmp.eq.s32.totalorder %s12, 0
    %p95 = por %p93, %p94
    %p96 = scmp.ne.s32.totalorder %s88, %s90
    %p97 = scmp.eq.s32.totalorder %s17, 1
    %p98 = por %p96, %p97
    %p99 = scmp.ne.s32.totalorder %s90, %s91
    %p100 = scmp.eq.s32.totalorder %s17, 0
    %p101 = por %p99, %p100
    %p102 = scmp.ne.s32.totalorder %s90, %s91
    %p103 = scmp.eq.s32.totalorder %s18, 1
    %p104 = por %p102, %p103
    %p106 = scmp.ne.s32.totalorder %s91, %s105
    %p107 = scmp.eq.s32.totalorder %s18, 0
    %p108 = por %p106, %p107
    %s110 = sadd.s32 %s109, 1
    %p113 = scmp.eq.s32.totalorder %s12, 1
    %p114 = scmp.ne.s32.totalorder %s109, %s111
    %p115 = scmp.eq.s32.totalorder %s12, 0
    %p116 = por %p114, %p115
    %p117 = scmp.ne.s32.totalorder %s109, %s111
    %p118 = scmp.eq.s32.totalorder %s17, 1
    %p119 = por %p117, %p118
    %p120 = scmp.ne.s32.totalorder %s111, %s112
    %p121 = scmp.eq.s32.totalorder %s17, 0
    %p122 = por %p120, %p121
    %p123 = scmp.ne.s32.totalorder %s111, %s112
    %p124 = scmp.eq.s32.totalorder %s18, 1
    %p125 = por %p123, %p124
    %p127 = scmp.ne.s32.totalorder %s112, %s126
    %p128 = scmp.eq.s32.totalorder %s18, 0
    %p129 = por %p127, %p128
    %s130 = ssub.s32 %s12, %s19
    %p131 = scmp.eq.s32.totalorder %s130, 0
    %s133 = sadd.s32 %s132, 1
    %s134 = scalar_select %p131, %s132, %s133
    %p137 = pneg %p131
    %p138 = scmp.eq.s32.totalorder %s12, 1
    %p139 = por %p137, %p138
    %p140 = scmp.ne.s32.totalorder %s132, %s135
    %p141 = scmp.eq.s32.totalorder %s12, 0
    %p142 = por %p140, %p141
    %p143 = scmp.ne.s32.totalorder %s132, %s135
    %p144 = scmp.eq.s32.totalorder %s17, 1
    %p145 = por %p143, %p144
    %p146 = scmp.ne.s32.totalorder %s135, %s136
    %p147 = scmp.eq.s32.totalorder %s17, 0
    %p148 = por %p146, %p147
    %p149 = scmp.ne.s32.totalorder %s135, %s136
    %p150 = scmp.eq.s32.totalorder %s18, 1
    %p151 = por %p149, %p150
    %p153 = scmp.ne.s32.totalorder %s136, %s152
    %p154 = scmp.eq.s32.totalorder %s18, 0
    %p155 = por %p153, %p154
    %p156 = scmp.le.s32.totalorder 1, %s12
    %p157 = scmp.lt.s32.totalorder %s12, 3
    %p158 = pnand %p156, %p157
    %p159 = pneg %p158
    // Predicated region
    $region9: #{rna_classifier_forward.1} parent=5 // pred_check
      _
    $region10: #{rna_classifier_forward.1} parent=5 // pred_check_branch
      %161 = sbr.rel (%p158) target = $region12
    $region11: #{rna_classifier_forward.1} parent=5 // pred_region
      %s162 = ssub.s32 %s12, 1
      // Predicated region
      $region13: #{rna_classifier_forward.1} parent=11 // pred_check
        %p163 = pneg %p59
      $region14: #{rna_classifier_forward.1} parent=11 // pred_check_branch
        %165 = sbr.rel (%p163) target = $region16
      $region15: #{rna_classifier_forward.1} parent=11 // pred_region
        _
      $region16: #{rna_classifier_forward.1} parent=11 // pred_fallthru
        _
      // Predicated region
      $region17: #{rna_classifier_forward.1} parent=11 // pred_check
        %p166 = pneg %p80
      $region18: #{rna_classifier_forward.1} parent=11 // pred_check_branch
        %168 = sbr.rel (%p166) target = $region20
      $region19: #{rna_classifier_forward.1} parent=11 // pred_region
        _
      $region20: #{rna_classifier_forward.1} parent=11 // pred_fallthru
        _
      // Predicated region
      $region21: #{rna_classifier_forward.1} parent=11 // pred_check
        %p169 = pneg %p101
      $region22: #{rna_classifier_forward.1} parent=11 // pred_check_branch
        %171 = sbr.rel (%p169) target = $region24
      $region23: #{rna_classifier_forward.1} parent=11 // pred_region
        _
      $region24: #{rna_classifier_forward.1} parent=11 // pred_fallthru
        _
      // Predicated region
      $region25: #{rna_classifier_forward.1} parent=11 // pred_check
        %p172 = pneg %p122
      $region26: #{rna_classifier_forward.1} parent=11 // pred_check_branch
        %174 = sbr.rel (%p172) target = $region28
      $region27: #{rna_classifier_forward.1} parent=11 // pred_region
        _
      $region28: #{rna_classifier_forward.1} parent=11 // pred_fallthru
        _
    $region12: #{rna_classifier_forward.1} parent=5 // pred_fallthru
      _
    %p175 = scmp.lt.s32.totalorder %s12, 2
    // Predicated region
    $region29: #{rna_classifier_forward.1} parent=5 // pred_check
      %p176 = pneg %p175
    $region30: #{rna_classifier_forward.1} parent=5 // pred_check_branch
      %178 = sbr.rel (%p176) target = $region32
    $region31: #{rna_classifier_forward.1} parent=5 // pred_region
      // Predicated region
      $region33: #{rna_classifier_forward.1} parent=31 // pred_check
        %p179 = pneg %p32
      $region34: #{rna_classifier_forward.1} parent=31 // pred_check_branch
        %181 = sbr.rel (%p179) target = $region36
      $region35: #{rna_classifier_forward.1} parent=31 // pred_region
        %p182 = scmp.lt.s32.totalorder %s12, 1
        %s183 = scalar_select %p182, %s12, 1
        %s184 = smul.addr %s183, 8
        %s185 = scalar_lea.vmem %s0, %s184
      $region36: #{rna_classifier_forward.1} parent=31 // pred_fallthru
        _
    $region32: #{rna_classifier_forward.1} parent=5 // pred_fallthru
      _
    %p186 = scmp.le.s32.totalorder 1, %s12
    %p187 = scmp.lt.s32.totalorder %s12, 3
    %p188 = pnand %p186, %p187
    %p189 = pneg %p188
    // Predicated region
    $region37: #{rna_classifier_forward.1} parent=5 // pred_check
      _
    $region38: #{rna_classifier_forward.1} parent=5 // pred_check_branch
      %191 = sbr.rel (%p188) target = $region40
    $region39: #{rna_classifier_forward.1} parent=5 // pred_region
      %s192 = ssub.s32 %s12, 1
      %p193 = scmp.lt.s32.totalorder %s17, 1
      %s194 = scalar_select %p193, %s17, 1
      %s195 = smul.addr %s194, 8
      %s196 = scalar_lea.vmem %s0, %s195
      %p197 = pneg %p38
      %p198 = pneg %p35
      %p199 = pneg %p59
      %p200 = pneg %p56
      %p201 = pneg %p80
      %p202 = pneg %p77
      %p203 = pneg %p101
      %p204 = pneg %p98
      %p205 = pneg %p122
      %p206 = pneg %p119
      %p207 = pneg %p148
      %p208 = pneg %p145
      %p209 = scmp.lt.s32.totalorder %s17, 1
      %s210 = scalar_select %p209, %s17, 1
      %s211 = scalar_lea.vmem %s5, %s210
      %p212 = scmp.lt.s32.totalorder %s17, 1
      %s213 = scalar_select %p212, %s17, 1
      %s214 = smul.addr %s213, 8
      %s215 = scalar_lea.vmem %s0, %s214
      %p216 = scmp.lt.s32.totalorder %s17, 1
      %s217 = scalar_select %p216, %s17, 1
      %s218 = scalar_lea.vmem %s5, %s217
      %v220 = vld [vmem:[%s215] sm:$0xff]
      %v221 = vpack.c.bf16 %v220, %v220
      %v222 = vld [vmem:[%s1] sm:$0xf]
      %v223 = vld [vmem:[%s1 + $0x4] sm:$0xf]
      %v224 = vld [vmem:[%s2] sm:$0x1]
      %v226 = vlaneseq
      %v227 = vshrl.u32 %v226, 7
      %v228 = vsub.s32 0, %v227
      %v229 = vrot.slane %v224, %v228
      %v233 = vunpack.c.l.b16 %v222
      %v234 = vunpack.c.l.b16 %v223
      %v235 = vpack.c.b16 %v234, %v233
      %vm237 = vcmask 130048
      %v239 = vsel %vm237, %v221, 0
      %241 = vmatprep.subr.bf16.mxu0 0
      %242 = vmatpush1.bf16.msra.mxu0 0
      %243 = vmatprep.subr.bf16.mxu0 0
      %244 = vmatpush1.bf16.msra.mxu0 0
      %245 = vmatprep.subr.bf16.mxu0 0
      %246 = vmatpush1.bf16.msra.mxu0 0
      %247 = vmatprep.subr.bf16.mxu0 0
      %248 = vmatpush1.bf16.msra.mxu0 0
      %249 = vmatprep.subr.bf16.mxu0 0
      %250 = vmatpush1.bf16.msra.mxu0 0
      %251 = vmatprep.subr.bf16.mxu0 0
      %252 = vmatpush1.bf16.msra.mxu0 0
      %253 = vmatprep.subr.bf16.mxu0 0
      %254 = vmatpush1.bf16.msra.mxu0 0
      %255 = vmatprep.subr.bf16.mxu0 0
      %256 = vmatpush1.bf16.msra.mxu0 %v235
      %257 = vmatprep.subr.bf16.mxu0 0
      %258 = vmatpush2.bf16.msra.mxu0 0
      %259 = vmatprep.subr.bf16.mxu0 0
      %260 = vmatpush2.bf16.msra.mxu0 0
      %261 = vmatprep.subr.bf16.mxu0 0
      %262 = vmatpush2.bf16.msra.mxu0 0
      %263 = vmatprep.subr.bf16.mxu0 0
      %264 = vmatpush2.bf16.msra.mxu0 0
      %265 = vmatprep.subr.bf16.mxu0 0
      %266 = vmatpush2.bf16.msra.mxu0 0
      %267 = vmatprep.subr.bf16.mxu0 0
      %268 = vmatpush2.bf16.msra.mxu0 0
      %269 = vmatprep.subr.bf16.mxu0 0
      %270 = vmatpush2.bf16.msra.mxu0 0
      %271 = vmatprep.subr.bf16.mxu0 0
      %272 = vmatpush2.bf16.msra.mxu0 0
      %273 = vmatprep.mubr.bf16.mxu0 0
      %274 = vmatmul.mubr.bf16.gmra.mxu0 %v239
      %v275 = vpop.f32.mrf.mxu0
      %v276 = vadd.f32 %v229, %v275
      %v277 = vpop.f32.mrf.mxu0
      %v278 = vpop.f32.mrf.mxu0
      %v279 = vpop.f32.mrf.mxu0
      %280 = vdwg.mxu0
      %v281 = vmax.f32 %v276, 0.0
      %v282 = vld [vmem:[%s3] sm:$0x1]
      %v283 = vpack.c.bf16 %v281, %v281
      %s284 = sld [smem:[#allocation2]]
      %v285 = vstv %s284
      %vm286 = vcmask 261120
      %v288 = vsel %vm286, %v282, 0
      %v291 = vsel %vm286, %v283, 0
      %293 = vmatprep.subr.bf16.mxu0 0
      %294 = vmatpush1.bf16.xpose.msra.mxu0 0
      %295 = vmatprep.subr.bf16.mxu0 0
      %296 = vmatpush1.bf16.xpose.msra.mxu0 0
      %297 = vmatprep.subr.bf16.mxu0 0
      %298 = vmatpush1.bf16.xpose.msra.mxu0 0
      %299 = vmatprep.subr.bf16.mxu0 0
      %300 = vmatpush1.bf16.xpose.msra.mxu0 0
      %301 = vmatprep.subr.bf16.mxu0 0
      %302 = vmatpush1.bf16.xpose.msra.mxu0 0
      %303 = vmatprep.subr.bf16.mxu0 0
      %304 = vmatpush1.bf16.xpose.msra.mxu0 0
      %305 = vmatprep.subr.bf16.mxu0 0
      %306 = vmatpush1.bf16.xpose.msra.mxu0 0
      %307 = vmatprep.subr.bf16.mxu0 0
      %308 = vmatpush1.bf16.xpose.msra.mxu0 %v291
      %309 = vmatprep.subr.bf16.mxu0 0
      %310 = vmatpush2.bf16.xpose.msra.mxu0 0
      %311 = vmatprep.subr.bf16.mxu0 0
      %312 = vmatpush2.bf16.xpose.msra.mxu0 0
      %313 = vmatprep.subr.bf16.mxu0 0
      %314 = vmatpush2.bf16.xpose.msra.mxu0 0
      %315 = vmatprep.subr.bf16.mxu0 0
      %316 = vmatpush2.bf16.xpose.msra.mxu0 0
      %317 = vmatprep.subr.bf16.mxu0 0
      %318 = vmatpush2.bf16.xpose.msra.mxu0 0
      %319 = vmatprep.subr.bf16.mxu0 0
      %320 = vmatpush2.bf16.xpose.msra.mxu0 0
      %321 = vmatprep.subr.bf16.mxu0 0
      %322 = vmatpush2.bf16.xpose.msra.mxu0 0
      %323 = vmatprep.subr.bf16.mxu0 0
      %324 = vmatpush2.bf16.xpose.msra.mxu0 0
      %325 = vmatprep.mubr.bf16.mxu0 0
      %326 = vmatmul.mubr.bf16.gmra.mxu0 %v288
      %v327 = vpop.f32.mrf.mxu0
      %v328 = vadd.f32 %v285, %v327
      %v329 = vpop.f32.mrf.mxu0
      %v330 = vpop.f32.mrf.mxu0
      %v331 = vpop.f32.mrf.mxu0
      %332 = vdwg.mxu0
      %v333 = vmul.f32 %v328, 0.5
      %v334 = vtanh.pop %v333
      %v335 = vadd.f32 %v334, 1.0
      %v336 = vmul.f32 %v335, 0.5
      %vm337 = vcmask 57344
      %338 = vst.msk [vmem:[%s218] sm:$0x1] %vm337, %v336
      %p339 = scmp.lt.s32.totalorder %s17, 1
      %s340 = scalar_select %p339, %s17, 1
      %s341 = scalar_lea.vmem %s5, %s340
      // Predicated region
      $region41: #{rna_classifier_forward.1} parent=39 // pred_check
        %p342 = pneg %p145
      $region42: #{rna_classifier_forward.1} parent=39 // pred_check_branch
        %344 = sbr.rel (%p342) target = $region44
      $region43: #{rna_classifier_forward.1} parent=39 // pred_region
        _
      $region44: #{rna_classifier_forward.1} parent=39 // pred_fallthru
        _
    $region40: #{rna_classifier_forward.1} parent=5 // pred_fallthru
      _
    %p345 = scmp.le.s32.totalorder 2, %s12
    // Predicated region
    $region45: #{rna_classifier_forward.1} parent=5 // pred_check
      %p346 = pneg %p345
    $region46: #{rna_classifier_forward.1} parent=5 // pred_check_branch
      %348 = sbr.rel (%p346) target = $region48
    $region47: #{rna_classifier_forward.1} parent=5 // pred_region
      %s349 = ssub.s32 %s12, 2
      // Predicated region
      $region49: #{rna_classifier_forward.1} parent=47 // pred_check
        %p350 = pneg %p151
      $region50: #{rna_classifier_forward.1} parent=47 // pred_check_branch
        %352 = sbr.rel (%p350) target = $region52
      $region51: #{rna_classifier_forward.1} parent=47 // pred_region
        %p353 = scmp.lt.s32.totalorder %s18, 1
        %s354 = scalar_select %p353, %s18, 1
        %s355 = scalar_lea.vmem %s5, %s354
      $region52: #{rna_classifier_forward.1} parent=47 // pred_fallthru
        _
    $region48: #{rna_classifier_forward.1} parent=5 // pred_fallthru
      _
  $region6: #{rna_classifier_forward.1} parent=0 // loop_footer
    %s16 = sadd.s32 1, %s12
  $region7: #{rna_classifier_forward.1} parent=0 // loop_footer_branch
    %11 = sbr.rel target = $region3
  $region8: #{rna_classifier_forward.1} parent=0 // loop_exit
    _

</llo_original>
